<compile_context>
chip_gen: v7x
topology: tpu7x:2x2x1
jax: 0.10.0
libtpu: 0.0.40
codegen_flags: <defaults>
</compile_context>

<pallas_src>
import math

import jax
import jax.numpy as jnp
from jax import lax
from jax.experimental import pallas as pl
from jax.experimental.pallas import tpu as pltpu


# ----------------------------- tiled linear -------------------------------- #
def linear(x2d, w, *, tm_cap=256, tn_cap=256, tk_cap=512):
    """y = x2d @ w.T with torch-style w of shape (out_features, in_features).

    Tiled matmul, grid=(M/tm, N/tn, K/tk), f32 VMEM accumulator over K.  The
    weight is consumed untransposed (dot_general contracts K of both operands).
    """
    M, K = x2d.shape
    N, K2 = w.shape
    assert K == K2
    tm = M if M <= tm_cap else tm_cap
    tn = N if N <= tn_cap else tn_cap
    tk = K if K <= tk_cap else tk_cap
    assert M % tm == 0 and N % tn == 0 and K % tk == 0, "shapes must tile evenly"

    def kernel(x_ref, w_ref, o_ref, acc_ref):
        @pl.when(pl.program_id(2) == 0)
        def _():
            acc_ref[...] = jnp.zeros_like(acc_ref)

        acc_ref[...] += lax.dot_general(
            x_ref[...], w_ref[...],
            dimension_numbers=(((1,), (1,)), ((), ())),   # contract K of both
            preferred_element_type=jnp.float32)

        @pl.when(pl.program_id(2) == pl.num_programs(2) - 1)
        def _():
            o_ref[...] = acc_ref[...].astype(o_ref.dtype)

    return pl.pallas_call(
        kernel,
        out_shape=jax.ShapeDtypeStruct((M, N), x2d.dtype),
        grid=(M // tm, N // tn, K // tk),
        in_specs=[
            pl.BlockSpec((tm, tk), lambda i, j, k: (i, k)),
            pl.BlockSpec((tn, tk), lambda i, j, k: (j, k)),
        ],
        out_specs=pl.BlockSpec((tm, tn), lambda i, j, k: (i, j)),
        scratch_shapes=[pltpu.VMEM((tm, tn), jnp.float32)],
        compiler_params=pltpu.CompilerParams(
            dimension_semantics=("parallel", "parallel", "arbitrary")),
    )(x2d, w)


# ------------------------- flash attention (causal) ------------------------ #
def _flash_attention(q, k, v, freqs_cos, freqs_sin, *, n_rep, block=None):
    """q: (B, H, S, hd) in split-RoPE head layout; k/v: (B, Hkv, S, hd).

    freqs_cos/sin: (S, hd // 2).  Returns (B, H, S, hd).
    """
    B, H, S, hd = q.shape
    _, Hkv, _, _ = k.shape
    assert H == Hkv * n_rep and hd % 2 == 0
    half = hd // 2
    blk = min(block if block is not None else 256, S)
    assert S % blk == 0, "seq length must tile evenly"
    n_tiles = S // blk
    scale = 1.0 / math.sqrt(hd)

    def kernel(q_ref, k_ref, v_ref, cq_ref, sq_ref, ck_ref, sk_ref, o_ref,
               qrot_ref, krot_ref, m_ref, l_ref, acc_ref):
        qi = pl.program_id(2)
        ki = pl.program_id(3)

        @pl.when(ki == 0)
        def _init():
            # Rotate + pre-scale q once per (b, h, q-tile); cache in VMEM.
            qf = q_ref[0, 0].astype(jnp.float32)            # (blk, hd)
            c = cq_ref[...].astype(jnp.float32)             # (blk, half)
            s = sq_ref[...].astype(jnp.float32)
            q1, q2 = qf[:, :half], qf[:, half:]
            qrot_ref[:, :half] = ((q1 * c - q2 * s) * scale).astype(qrot_ref.dtype)
            qrot_ref[:, half:] = ((q1 * s + q2 * c) * scale).astype(qrot_ref.dtype)
            m_ref[...] = jnp.full(m_ref.shape, -1e30, dtype=jnp.float32)
            l_ref[...] = jnp.zeros(l_ref.shape, dtype=jnp.float32)
            acc_ref[...] = jnp.zeros(acc_ref.shape, dtype=jnp.float32)

        def step(masked):
            kf = k_ref[0, 0].astype(jnp.float32)            # (blk, hd)
            c = ck_ref[...].astype(jnp.float32)
            s = sk_ref[...].astype(jnp.float32)
            k1, k2 = kf[:, :half], kf[:, half:]
            krot_ref[:, :half] = (k1 * c - k2 * s).astype(krot_ref.dtype)
            krot_ref[:, half:] = (k1 * s + k2 * c).astype(krot_ref.dtype)

            scores = lax.dot_general(                       # (blk, blk)
                qrot_ref[...], krot_ref[...],
                dimension_numbers=(((1,), (1,)), ((), ())),
                preferred_element_type=jnp.float32)
            if masked:  # only diagonal tiles pay for the mask
                row = lax.broadcasted_iota(jnp.int32, scores.shape, 0)
                col = lax.broadcasted_iota(jnp.int32, scores.shape, 1)
                scores = jnp.where(col <= row, scores, -1e30)

            m_prev = m_ref[...]
            m_new = jnp.maximum(m_prev, jnp.max(scores, axis=-1, keepdims=True))
            alpha = jnp.exp(m_prev - m_new)
            p = jnp.exp(scores - m_new)
            l_ref[...] = alpha * l_ref[...] + jnp.sum(p, axis=-1, keepdims=True)
            v_blk = v_ref[0, 0]
            acc_ref[...] = alpha * acc_ref[...] + jnp.dot(
                p.astype(v_blk.dtype), v_blk, preferred_element_type=jnp.float32)
            m_ref[...] = m_new

        @pl.when(ki < qi)          # fully-unmasked tiles
        def _():
            step(masked=False)

        @pl.when(ki == qi)         # diagonal tile: mask + finalize
        def _():
            step(masked=True)
            inv_l = pl.reciprocal(l_ref[...], approx=False)
            o_ref[0, 0] = (acc_ref[...] * inv_l).astype(o_ref.dtype)
        # ki > qi: fully masked -> skipped entirely (and K/V not re-fetched,
        # see the min(ki, qi) clamp in the index_maps below).

    q_spec = pl.BlockSpec((1, 1, blk, hd), lambda b, h, qi, ki: (b, h, qi, 0))
    kv_spec = pl.BlockSpec(
        (1, 1, blk, hd),
        lambda b, h, qi, ki: (b, h // n_rep, jnp.minimum(ki, qi), 0))
    cq_spec = pl.BlockSpec((blk, half), lambda b, h, qi, ki: (qi, 0))
    ck_spec = pl.BlockSpec((blk, half),
                           lambda b, h, qi, ki: (jnp.minimum(ki, qi), 0))

    return pl.pallas_call(
        kernel,
        out_shape=jax.ShapeDtypeStruct((B, H, S, hd), q.dtype),
        grid=(B, H, n_tiles, n_tiles),
        in_specs=[q_spec, kv_spec, kv_spec, cq_spec, cq_spec, ck_spec, ck_spec],
        out_specs=q_spec,
        scratch_shapes=[
            pltpu.VMEM((blk, hd), q.dtype),        # rotated, pre-scaled q
            pltpu.VMEM((blk, hd), k.dtype),        # rotated k
            pltpu.VMEM((blk, 1), jnp.float32),     # running max m
            pltpu.VMEM((blk, 1), jnp.float32),     # running sum l
            pltpu.VMEM((blk, hd), jnp.float32),    # output accumulator
        ],
        compiler_params=pltpu.CompilerParams(
            dimension_semantics=("parallel", "parallel", "parallel", "arbitrary")),
    )(q, k, v, freqs_cos, freqs_sin, freqs_cos, freqs_sin)


# --------------------------------- wrapper --------------------------------- #
def attention_forward(x, freqs_cos, freqs_sin, wq, wk, wv, wo,
                      *, n_heads, n_kv_heads, attn_block=None):
    B, S, D = x.shape
    head_dim = D // n_heads
    n_rep = n_heads // n_kv_heads
    assert head_dim % 2 == 0

    # Re-parameterize wq/wk: de-interleave each head's output features
    # (even pair members first, odd second) so RoPE takes the rotate-half /
    # split form inside the kernel.  This is a pure permutation of q/k head
    # features -> q.k dot products (and therefore the whole attention output)
    # are unchanged.  In a real model this permutation would be folded into
    # the checkpoint once instead of per call.
    def deinterleave(w, n_h):
        w4 = w.reshape(n_h, head_dim // 2, 2, D)
        return jnp.transpose(w4, (0, 2, 1, 3)).reshape(n_h * head_dim, D)

    x2d = x.reshape(B * S, D)
    q = linear(x2d, deinterleave(wq, n_heads))
    k = linear(x2d, deinterleave(wk, n_kv_heads))
    v = linear(x2d, wv)

    q = jnp.transpose(q.reshape(B, S, n_heads, head_dim), (0, 2, 1, 3))
    k = jnp.transpose(k.reshape(B, S, n_kv_heads, head_dim), (0, 2, 1, 3))
    v = jnp.transpose(v.reshape(B, S, n_kv_heads, head_dim), (0, 2, 1, 3))

    attn = _flash_attention(q, k, v, freqs_cos, freqs_sin,
                            n_rep=n_rep, block=attn_block)      # (B, H, S, hd)

    # TODO(synk): pack >=128/head_dim heads per output block (lane-dense slab)
    # and write straight into (B, S, D) to drop this transpose + the masked
    # 32-lane stores.
    attn2d = jnp.transpose(attn, (0, 2, 1, 3)).reshape(B * S, n_heads * head_dim)
    out = linear(attn2d, wo).reshape(B, S, D)
    # attn_dropout / resid_dropout are no-ops with dropout=0.0 (eval).
    return out


# ---------------------------- pure-JAX reference --------------------------- #
def attention_reference(x, freqs_cos, freqs_sin, wq, wk, wv, wo,
                        *, n_heads, n_kv_heads):
    B, S, D = x.shape
    head_dim = D // n_heads
    n_rep = n_heads // n_kv_heads

    xq = (x @ wq.T).reshape(B, S, n_heads, head_dim)
    xk = (x @ wk.T).reshape(B, S, n_kv_heads, head_dim)
    xv = (x @ wv.T).reshape(B, S, n_kv_heads, head_dim)

    def rope(t):
        tr = t.reshape(t.shape[:-1] + (head_dim // 2, 2))
        t_r, t_i = tr[..., 0], tr[..., 1]
        c = freqs_cos[None, :, None, :]
        s = freqs_sin[None, :, None, :]
        o_r = t_r * c - t_i * s
        o_i = t_r * s + t_i * c
        return jnp.stack([o_r, o_i], axis=-1).reshape(t.shape)

    xq = rope(xq)
    xk = rope(xk)
    xk = jnp.repeat(xk, n_rep, axis=2)
    xv = jnp.repeat(xv, n_rep, axis=2)

    q = jnp.transpose(xq, (0, 2, 1, 3))
    k = jnp.transpose(xk, (0, 2, 1, 3))
    v = jnp.transpose(xv, (0, 2, 1, 3))

    scores = jnp.einsum("bhqd,bhkd->bhqk", q, k) / math.sqrt(head_dim)
    mask = jnp.tril(jnp.ones((S, S), bool))
    scores = jnp.where(mask[None, None], scores, -jnp.inf)
    p = jax.nn.softmax(scores, axis=-1)
    o = jnp.einsum("bhqk,bhkd->bhqd", p, v)
    o = jnp.transpose(o, (0, 2, 1, 3)).reshape(B, S, -1)
    return o @ wo.T


# ----------------------------------- main ----------------------------------- #
if __name__ == "__main__":
    # Small config consistent with ModelConfig semantics
    # (dim % n_heads == 0, n_heads % n_kv_heads == 0).
    B, S = 2, 16
    dim, n_heads, n_kv_heads = 128, 4, 2
    head_dim = dim // n_heads  # 32

    key = jax.random.PRNGKey(0)
    kx, kq, kk, kv_, ko = jax.random.split(key, 5)
    x = jax.random.normal(kx, (B, S, dim), jnp.float32)
    wq = 0.02 * jax.random.normal(kq, (n_heads * head_dim, dim), jnp.float32)
    wk = 0.02 * jax.random.normal(kk, (n_kv_heads * head_dim, dim), jnp.float32)
    wv = 0.02 * jax.random.normal(kv_, (n_kv_heads * head_dim, dim), jnp.float32)
    wo = 0.02 * jax.random.normal(ko, (dim, n_heads * head_dim), jnp.float32)

    # RoPE tables: (seq, head_dim // 2), llama-style.
    inv_freq = 1.0 / (
        10000.0 ** (jnp.arange(0, head_dim, 2, dtype=jnp.float32) / head_dim)
    )
    t = jnp.arange(S, dtype=jnp.float32)
    freqs = jnp.outer(t, inv_freq)
    freqs_cos = jnp.cos(freqs)
    freqs_sin = jnp.sin(freqs)

    # attn_block=8 -> 2x2 causal tile grid: exercises the unmasked, diagonal
    # and skipped-tile paths of the flash kernel on this tiny shape.
    out = attention_forward(
        x, freqs_cos, freqs_sin, wq, wk, wv, wo,
        n_heads=n_heads, n_kv_heads=n_kv_heads, attn_block=8,
    )
    out = jax.block_until_ready(out)

    ref = attention_reference(
        x, freqs_cos, freqs_sin, wq, wk, wv, wo,
        n_heads=n_heads, n_kv_heads=n_kv_heads,
    )
    assert out.shape == (B, S, dim)
    assert jnp.allclose(out, ref, atol=1e-4, rtol=1e-4), "mismatch vs reference"
    print("KERNEL_OK")
</pallas_src>

<mosaic_0001>
module attributes {stable_mosaic.version = 11 : i64} {
  func.func @kernel(%arg0: i32, %arg1: i32, %arg2: i32, %arg3: memref<32x128xf32, #tpu.memory_space<vmem>>, %arg4: memref<128x128xf32, #tpu.memory_space<vmem>>, %arg5: memref<32x128xf32, #tpu.memory_space<vmem>>, %arg6: memref<32x128xf32, #tpu.memory_space<vmem>>) attributes {dimension_semantics = [#tpu.dimension_semantics<parallel>, #tpu.dimension_semantics<parallel>, #tpu.dimension_semantics<arbitrary>], iteration_bounds = array<i64: 1, 1, 1>, scalar_prefetch = 0 : i64, scratch_operands = 1 : i64, tpu.core_type = #tpu.core_type<tc>, window_params = [{transform_indices = @transform_0, window_bounds = array<i64: 32, 128>}, {transform_indices = @transform_1, window_bounds = array<i64: 128, 128>}, {transform_indices = @transform_2, window_bounds = array<i64: 32, 128>}]} {
    %c0_i32 = arith.constant 0 : i32
    %0 = arith.cmpi eq, %arg2, %c0_i32 : i32
    %1 = arith.extui %0 : i1 to i32
    %c0_i32_0 = arith.constant 0 : i32
    %2 = arith.cmpi ne, %1, %c0_i32_0 : i32
    scf.if %2 {
      %cst_10 = arith.constant 0.000000e+00 : f32
      %12 = vector.broadcast %cst_10 : f32 to vector<32x128xf32>
      %c0_11 = arith.constant 0 : index
      %c0_12 = arith.constant 0 : index
      %13 = vector.load %arg6[%c0_11, %c0_12] : memref<32x128xf32, #tpu.memory_space<vmem>>, vector<32x128xf32>
      tpu.vector_store %arg6[%c0_11, %c0_12], %12 {strides = array<i32>} : memref<32x128xf32, #tpu.memory_space<vmem>>, vector<32x128xf32>,
    } else {
    }
    %c0 = arith.constant 0 : index
    %c0_1 = arith.constant 0 : index
    %3 = vector.load %arg6[%c0, %c0_1] : memref<32x128xf32, #tpu.memory_space<vmem>>, vector<32x128xf32>
    %c0_2 = arith.constant 0 : index
    %c0_3 = arith.constant 0 : index
    %4 = vector.load %arg3[%c0_2, %c0_3] : memref<32x128xf32, #tpu.memory_space<vmem>>, vector<32x128xf32>
    %c0_4 = arith.constant 0 : index
    %c0_5 = arith.constant 0 : index
    %5 = vector.load %arg4[%c0_4, %c0_5] : memref<128x128xf32, #tpu.memory_space<vmem>>, vector<128x128xf32>
    %cst = arith.constant dense<0.000000e+00> : vector<32x128xf32>
    %6 = tpu.matmul %4, %5, %cst {dimension_numbers = #tpu.dot_dimension_numbers<[1], [1], [0], [0], [0, 0, 1, 0], [], []>} : vector<32x128xf32>, vector<128x128xf32>, vector<32x128xf32> -> vector<32x128xf32>
    %7 = arith.addf %3, %6 : vector<32x128xf32>
    %c0_6 = arith.constant 0 : index
    %c0_7 = arith.constant 0 : index
    %8 = vector.load %arg6[%c0_6, %c0_7] : memref<32x128xf32, #tpu.memory_space<vmem>>, vector<32x128xf32>
    tpu.vector_store %arg6[%c0_6, %c0_7], %7 {strides = array<i32>} : memref<32x128xf32, #tpu.memory_space<vmem>>, vector<32x128xf32>,
    %c0_i32_8 = arith.constant 0 : i32
    %9 = arith.cmpi eq, %arg2, %c0_i32_8 : i32
    %10 = arith.extui %9 : i1 to i32
    %c0_i32_9 = arith.constant 0 : i32
    %11 = arith.cmpi ne, %10, %c0_i32_9 : i32
    scf.if %11 {
      %c0_10 = arith.constant 0 : index
      %c0_11 = arith.constant 0 : index
      %12 = vector.load %arg6[%c0_10, %c0_11] : memref<32x128xf32, #tpu.memory_space<vmem>>, vector<32x128xf32>
      %c0_12 = arith.constant 0 : index
      %c0_13 = arith.constant 0 : index
      %13 = vector.load %arg5[%c0_12, %c0_13] : memref<32x128xf32, #tpu.memory_space<vmem>>, vector<32x128xf32>
      tpu.vector_store %arg5[%c0_12, %c0_13], %12 {strides = array<i32>} : memref<32x128xf32, #tpu.memory_space<vmem>>, vector<32x128xf32>,
    } else {
    }
    return
  }
  func.func @transform_0(%arg0: i32, %arg1: i32, %arg2: i32) -> (i32, i32) {
    %c0_i32 = arith.constant 0 : i32
    return %arg0, %arg2 : i32, i32
  }
  func.func @transform_1(%arg0: i32, %arg1: i32, %arg2: i32) -> (i32, i32) {
    %c0_i32 = arith.constant 0 : i32
    return %arg1, %arg2 : i32, i32
  }
  func.func @transform_2(%arg0: i32, %arg1: i32, %arg2: i32) -> (i32, i32) {
    %c0_i32 = arith.constant 0 : i32
    return %arg0, %arg1 : i32, i32
  }
}

</mosaic_0001>

<llo_original>
// kernel: tpu_custom_call.1
$region0: #{tpu_custom_call.1}
  #allocation0 [shape = 'u32[]', space=smem, size = 0x4, offset = 0x4, fixed_abs, tag = 'smem constant byte address 0x4 - core index']
  #allocation1 [shape = 'u32[144,128]{1,0:T(1,128)}', space=vmem, size = 0x12000, scoped, tag = 'internal scratch']
  #allocation2 [shape = 'f32[32,128]{1,0:T(8,128)}', space=vmem, size = 0x4000, scoped, tag = 'scratch operand']
  %s0 = inlined_call_operand.hbm [shape: f32[32,128], index: 0, kind: input, shape index: {}]
  %s1 = inlined_call_operand.hbm [shape: f32[128,128], index: 1, kind: input, shape index: {}]
  %s2 = inlined_call_operand.hbm [shape: f32[32,128], index: 2, kind: output, shape index: {}]
  %s3 = sld [smem:[#allocation0]]
  $region34: #{tpu_custom_call.1} parent=0
    _
  %s5 = ssub.s32 1, %s3
  %s6 = scalar_select 0, %s5, %s3
  $region1: #{tpu_custom_call.1} parent=0
    #allocation3 [shape = 'u8[16384]{0}', space=vmem, size = 0x4000, scoped, tag = 'input window, operand 0, single buffered']
    #allocation4 [shape = 's32[1]{0}', space=sflag, size = 0x4, scoped, tag = 'scoped memory for tpu_custom_call.1']
    #allocation5 [shape = 's32[1]{0}', space=sflag, size = 0x4, scoped, tag = 'scoped memory for tpu_custom_call.1']
    #allocation6 [shape = 'u8[65536]{0}', space=vmem, size = 0x10000, scoped, tag = 'input window, operand 1, single buffered']
    #allocation7 [shape = 's32[1]{0}', space=sflag, size = 0x4, scoped, tag = 'scoped memory for tpu_custom_call.1']
    #allocation8 [shape = 'u8[16384]{0}', space=vmem, size = 0x4000, scoped, tag = 'output window, operand 0, single buffered']
    %7 = vsyncpa [#allocation4], 0
    %8 = vsyncpa [#allocation7], 0
    %9 = vsyncpa [#allocation5], 0
    // Predicated region
    $region2: #{tpu_custom_call.1} parent=1 // pred_check
      _
    $region3: #{tpu_custom_call.1} parent=1 // pred_check_branch
      %11 = sbr.rel (0) target = $region5
    $region4: #{tpu_custom_call.1} parent=1 // pred_region
      %s13 = ssub.s32 512, 512
      %14 = vsyncadd [#allocation4], %s13
      %s15 = sshll.u32 [#allocation3], 4
      %s16 = int_to_ptr.vmem [resolvable:$true] %s15
      %21 = dma.hbm_to_vmem [thread:$0]  %s0, 512, %s16, [#allocation4], 128, 128, 8
    $region5: #{tpu_custom_call.1} parent=1 // pred_fallthru
      _
    // Predicated region
    $region6: #{tpu_custom_call.1} parent=1 // pred_check
      _
    $region7: #{tpu_custom_call.1} parent=1 // pred_check_branch
      %23 = sbr.rel (0) target = $region9
    $region8: #{tpu_custom_call.1} parent=1 // pred_region
      %s25 = ssub.s32 2048, 2048
      %26 = vsyncadd [#allocation7], %s25
      %s27 = sshll.u32 [#allocation6], 4
      %s28 = int_to_ptr.vmem [resolvable:$true] %s27
      %33 = dma.hbm_to_vmem [thread:$0]  %s1, 2048, %s28, [#allocation7], 128, 128, 8
    $region9: #{tpu_custom_call.1} parent=1 // pred_fallthru
      _
    // Predicated region
    $region10: #{tpu_custom_call.1} parent=1 // pred_check
      _
    $region11: #{tpu_custom_call.1} parent=1 // pred_check_branch
      %35 = sbr.rel (0) target = $region13
    $region12: #{tpu_custom_call.1} parent=1 // pred_region
      %36 = dma.done [#allocation4], 512
    $region13: #{tpu_custom_call.1} parent=1 // pred_fallthru
      _
    // Predicated region
    $region14: #{tpu_custom_call.1} parent=1 // pred_check
      _
    $region15: #{tpu_custom_call.1} parent=1 // pred_check_branch
      %38 = sbr.rel (0) target = $region17
    $region16: #{tpu_custom_call.1} parent=1 // pred_region
      %39 = dma.done [#allocation7], 2048
    $region17: #{tpu_custom_call.1} parent=1 // pred_fallthru
      _
    %p40 = scmp.eq.s32.totalorder 0, 0
    // Predicated region
    $region18: #{tpu_custom_call.1} parent=1 // pred_check
      %p41 = pneg %p40
    $region19: #{tpu_custom_call.1} parent=1 // pred_check_branch
      %43 = sbr.rel (%p41) target = $region21
    $region20: #{tpu_custom_call.1} parent=1 // pred_region
      %44 = vst [vmem:[#allocation2] sm:$0xff] 0.0
      %45 = vst [vmem:[#allocation2 + $0x8] sm:$0xff] 0.0
      %46 = vst [vmem:[#allocation2 + $0x10] sm:$0xff] 0.0
      %47 = vst [vmem:[#allocation2 + $0x18] sm:$0xff] 0.0
    $region21: #{tpu_custom_call.1} parent=1 // pred_fallthru
      _
    %v48 = vld [vmem:[#allocation2] sm:$0xff]
    %v49 = vld [vmem:[#allocation2 + $0x8] sm:$0xff]
    %v50 = vld [vmem:[#allocation2 + $0x10] sm:$0xff]
    %v51 = vld [vmem:[#allocation2 + $0x18] sm:$0xff]
    %v52 = vld [vmem:[#allocation3] sm:$0xff]
    %v53 = vld [vmem:[#allocation3 + $0x8] sm:$0xff]
    %v54 = vld [vmem:[#allocation3 + $0x10] sm:$0xff]
    %v55 = vld [vmem:[#allocation3 + $0x18] sm:$0xff]
    %v56 = vld [vmem:[#allocation6] sm:$0xff]
    %v57 = vld [vmem:[#allocation6 + $0x8] sm:$0xff]
    %v58 = vld [vmem:[#allocation6 + $0x10] sm:$0xff]
    %v59 = vld [vmem:[#allocation6 + $0x18] sm:$0xff]
    %v60 = vld [vmem:[#allocation6 + $0x20] sm:$0xff]
    %v61 = vld [vmem:[#allocation6 + $0x28] sm:$0xff]
    %v62 = vld [vmem:[#allocation6 + $0x30] sm:$0xff]
    %v63 = vld [vmem:[#allocation6 + $0x38] sm:$0xff]
    %v64 = vld [vmem:[#allocation6 + $0x40] sm:$0xff]
    %v65 = vld [vmem:[#allocation6 + $0x48] sm:$0xff]
    %v66 = vld [vmem:[#allocation6 + $0x50] sm:$0xff]
    %v67 = vld [vmem:[#allocation6 + $0x58] sm:$0xff]
    %v68 = vld [vmem:[#allocation6 + $0x60] sm:$0xff]
    %v69 = vld [vmem:[#allocation6 + $0x68] sm:$0xff]
    %v70 = vld [vmem:[#allocation6 + $0x70] sm:$0xff]
    %v71 = vld [vmem:[#allocation6 + $0x78] sm:$0xff]
    %72 = vmatprep.subr.mxu0 0.0
    %73 = vmatpush1.xpose.msra.mxu0 %v56
    %74 = vmatprep.subr.mxu0 0.0
    %75 = vmatpush1.xpose.msra.mxu0 %v57
    %76 = vmatprep.subr.mxu0 0.0
    %77 = vmatpush1.xpose.msra.mxu0 %v58
    %78 = vmatprep.subr.mxu0 0.0
    %79 = vmatpush1.xpose.msra.mxu0 %v59
    %80 = vmatprep.subr.mxu0 0.0
    %81 = vmatpush1.xpose.msra.mxu0 %v60
    %82 = vmatprep.subr.mxu0 0.0
    %83 = vmatpush1.xpose.msra.mxu0 %v61
    %84 = vmatprep.subr.mxu0 0.0
    %85 = vmatpush1.xpose.msra.mxu0 %v62
    %86 = vmatprep.subr.mxu0 0.0
    %87 = vmatpush1.xpose.msra.mxu0 %v63
    %88 = vmatprep.subr.mxu0 0.0
    %89 = vmatpush1.xpose.msra.mxu0 %v64
    %90 = vmatprep.subr.mxu0 0.0
    %91 = vmatpush1.xpose.msra.mxu0 %v65
    %92 = vmatprep.subr.mxu0 0.0
    %93 = vmatpush1.xpose.msra.mxu0 %v66
    %94 = vmatprep.subr.mxu0 0.0
    %95 = vmatpush1.xpose.msra.mxu0 %v67
    %96 = vmatprep.subr.mxu0 0.0
    %97 = vmatpush1.xpose.msra.mxu0 %v68
    %98 = vmatprep.subr.mxu0 0.0
    %99 = vmatpush1.xpose.msra.mxu0 %v69
    %100 = vmatprep.subr.mxu0 0.0
    %101 = vmatpush1.xpose.msra.mxu0 %v70
    %102 = vmatprep.subr.mxu0 0.0
    %103 = vmatpush1.xpose.msra.mxu0 %v71
    %104 = vmatprep.subr.mxu0 0.0
    %105 = vmatpush1.xpose.msra.mxu0 0.0
    %106 = vmatprep.subr.mxu0 0.0
    %107 = vmatpush1.xpose.msra.mxu0 0.0
    %108 = vmatprep.subr.mxu0 0.0
    %109 = vmatpush1.xpose.msra.mxu0 0.0
    %110 = vmatprep.subr.mxu0 0.0
    %111 = vmatpush1.xpose.msra.mxu0 0.0
    %112 = vmatprep.subr.mxu0 0.0
    %113 = vmatpush1.xpose.msra.mxu0 0.0
    %114 = vmatprep.subr.mxu0 0.0
    %115 = vmatpush1.xpose.msra.mxu0 0.0
    %116 = vmatprep.subr.mxu0 0.0
    %117 = vmatpush1.xpose.msra.mxu0 0.0
    %118 = vmatprep.subr.mxu0 0.0
    %119 = vmatpush1.xpose.msra.mxu0 0.0
    %120 = vmatprep.subr.mxu0 0.0
    %121 = vmatpush1.xpose.msra.mxu0 0.0
    %122 = vmatprep.subr.mxu0 0.0
    %123 = vmatpush1.xpose.msra.mxu0 0.0
    %124 = vmatprep.subr.mxu0 0.0
    %125 = vmatpush1.xpose.msra.mxu0 0.0
    %126 = vmatprep.subr.mxu0 0.0
    %127 = vmatpush1.xpose.msra.mxu0 0.0
    %128 = vmatprep.subr.mxu0 0.0
    %129 = vmatpush1.xpose.msra.mxu0 0.0
    %130 = vmatprep.subr.mxu0 0.0
    %131 = vmatpush1.xpose.msra.mxu0 0.0
    %132 = vmatprep.subr.mxu0 0.0
    %133 = vmatpush1.xpose.msra.mxu0 0.0
    %134 = vmatprep.subr.mxu0 0.0
    %135 = vmatpush1.xpose.msra.mxu0 0.0
    %136 = vmatprep.mubr.f32.mxu0 0.0
    %137 = vmatmul.mubr.f32.gmra.mrb[0].mxu0 %v52
    %v138 = vpop.f32.mrb[0].mxu0
    %v139 = vadd.f32 0.0, %v138
    %v140 = vpop.f32.mrb[0].mxu0
    %141 = vmatprep.mubr.f32.mxu0 0.0
    %142 = vmatmul.mubr.f32.gmra.mrb[0].mxu0 %v53
    %v143 = vpop.f32.mrb[0].mxu0
    %v144 = vadd.f32 0.0, %v143
    %v145 = vpop.f32.mrb[0].mxu0
    %146 = vmatprep.mubr.f32.mxu0 0.0
    %147 = vmatmul.mubr.f32.gmra.mrb[0].mxu0 %v54
    %v148 = vpop.f32.mrb[0].mxu0
    %v149 = vadd.f32 0.0, %v148
    %v150 = vpop.f32.mrb[0].mxu0
    %151 = vmatprep.mubr.f32.mxu0 0.0
    %152 = vmatmul.mubr.f32.gmra.mrb[0].mxu0 %v55
    %v153 = vpop.f32.mrb[0].mxu0
    %v154 = vadd.f32 0.0, %v153
    %v155 = vpop.f32.mrb[0].mxu0
    %156 = vdwg.mxu0
    %v157 = vadd.f32 %v48, %v139
    %v158 = vadd.f32 %v49, %v144
    %v159 = vadd.f32 %v50, %v149
    %v160 = vadd.f32 %v51, %v154
    %161 = vst [vmem:[#allocation2] sm:$0xff] %v157
    %162 = vst [vmem:[#allocation2 + $0x8] sm:$0xff] %v158
    %163 = vst [vmem:[#allocation2 + $0x10] sm:$0xff] %v159
    %164 = vst [vmem:[#allocation2 + $0x18] sm:$0xff] %v160
    // Predicated region
    $region22: #{tpu_custom_call.1} parent=1 // pred_check
      %p165 = pneg %p40
    $region23: #{tpu_custom_call.1} parent=1 // pred_check_branch
      %167 = sbr.rel (%p165) target = $region25
    $region24: #{tpu_custom_call.1} parent=1 // pred_region
      %v168 = vld [vmem:[#allocation2] sm:$0xff]
      %v169 = vld [vmem:[#allocation2 + $0x8] sm:$0xff]
      %v170 = vld [vmem:[#allocation2 + $0x10] sm:$0xff]
      %v171 = vld [vmem:[#allocation2 + $0x18] sm:$0xff]
      %172 = vst [vmem:[#allocation8] sm:$0xff] %v168
      %173 = vst [vmem:[#allocation8 + $0x8] sm:$0xff] %v169
      %174 = vst [vmem:[#allocation8 + $0x10] sm:$0xff] %v170
      %175 = vst [vmem:[#allocation8 + $0x18] sm:$0xff] %v171
    $region25: #{tpu_custom_call.1} parent=1 // pred_fallthru
      _
    // Predicated region
    $region26: #{tpu_custom_call.1} parent=1 // pred_check
      _
    $region27: #{tpu_custom_call.1} parent=1 // pred_check_branch
      %177 = sbr.rel (0) target = $region29
    $region28: #{tpu_custom_call.1} parent=1 // pred_region
      %s179 = ssub.s32 512, 512
      %180 = vsyncadd [#allocation5], %s179
      %s181 = sshll.u32 [#allocation8], 4
      %s182 = int_to_ptr.vmem [resolvable:$true] %s181
      %187 = dma.vmem_to_hbm [thread:$0]  %s182, 512, %s2, [#allocation5], 128, 128, 8
    $region29: #{tpu_custom_call.1} parent=1 // pred_fallthru
      _
    // Predicated region
    $region30: #{tpu_custom_call.1} parent=1 // pred_check
      _
    $region31: #{tpu_custom_call.1} parent=1 // pred_check_branch
      %189 = sbr.rel (0) target = $region33
    $region32: #{tpu_custom_call.1} parent=1 // pred_region
      %190 = dma.done [#allocation5], 512
    $region33: #{tpu_custom_call.1} parent=1 // pred_fallthru
      _
    %191 = vsyncpa [#allocation4], 1
    %192 = vsyncpa [#allocation7], 1
    %193 = vsyncpa [#allocation5], 1

</llo_original>
